<compile_context>
chip_gen: v7x
topology: tpu7x:2x2x1
jax: 0.10.0
libtpu: 0.0.40
codegen_flags: <defaults>
</compile_context>

<pallas_src>
import functools

import jax
import jax.numpy as jnp
from jax.experimental import pallas as pl
from jax.experimental.pallas import tpu as pltpu


def _round_up(x, m):
    return (x + m - 1) // m * m


def _vmem_cap_bytes():
    """Per-generation VMEM request cap: leave headroom on v7x (64 MiB/TC), use more on v5e/v6e."""
    try:
        kind = jax.devices()[0].device_kind.lower().replace(" ", "")
    except Exception:  # pragma: no cover - defensive
        kind = ""
    if "v7" in kind or "tpu7" in kind:
        return 56 * 1024 * 1024
    return 100 * 1024 * 1024


def _fit_tile(requested, n_rows, per_row_bytes, fixed_bytes, cap):
    """Pick a token tile that fits the VMEM cap; shrink the tile rather than the limit."""
    tn = max(8, min(_round_up(requested, 8), _round_up(n_rows, 8)))
    # Megacore balance (v7x = 2 TCs): prefer at least 2 grid steps when there is work to split.
    if n_rows > 8 and -(-n_rows // tn) < 2:
        tn = max(8, _round_up(-(-n_rows // 2), 8))
    while tn > 8 and fixed_bytes + tn * per_row_bytes > cap:
        tn = max(8, _round_up(tn // 2, 8))
    vmem_limit = int(min(max(1.25 * (fixed_bytes + tn * per_row_bytes), 32 * 1024 * 1024), cap))
    return tn, vmem_limit


def _final_layer_kernel(x_ref, c_ref, w_ada_ref, b_ada_ref, w_lin_ref, b_lin_ref, o_ref):
    """Per-token conditioning: fused adaLN matmul + RMSNorm + modulate + final linear."""
    C = x_ref.shape[-1]

    # adaLN_modulation: SiLU(c) in f32 (EUP), then a single fused (tn,C)@(C,2C) dot in the native
    # weight dtype (bf16 by default) with f32 accumulation; slice shift / scale halves.
    cf = c_ref[...].astype(jnp.float32)
    silu_c = (cf * jax.nn.sigmoid(cf)).astype(w_ada_ref.dtype)
    ada = jnp.dot(silu_c, w_ada_ref[...], preferred_element_type=jnp.float32)
    ada = ada + b_ada_ref[...].astype(jnp.float32)
    shift = ada[:, :C]
    scale = ada[:, C:]

    # RMSNorm (no learnable weight), eps=1e-6, computed in f32, then .type_as(x).
    xf = x_ref[...].astype(jnp.float32)
    xn = xf * jax.lax.rsqrt(jnp.mean(xf * xf, axis=-1, keepdims=True) + 1e-6)
    xn = xn.astype(x_ref.dtype)

    # modulate + final linear ((tn,C)@(C,out_Cp)), f32 accumulation on the MXU.
    mod = xn.astype(jnp.float32) * (1.0 + scale) + shift
    out = jnp.dot(mod.astype(w_lin_ref.dtype), w_lin_ref[...],
                  preferred_element_type=jnp.float32)
    o_ref[...] = (out + b_lin_ref[...].astype(jnp.float32)).astype(o_ref.dtype)


def _final_layer_hoisted_kernel(x_ref, ada_ref, w_lin_ref, b_lin_ref, o_ref):
    """Per-sample conditioning: shift/scale precomputed once per sample outside the token grid."""
    C = x_ref.shape[-1]
    ada = ada_ref[0].astype(jnp.float32)                    # (1, 2C)
    shift = ada[:, :C]
    scale = ada[:, C:]

    xf = x_ref[0].astype(jnp.float32)                       # (tt, C)
    xn = xf * jax.lax.rsqrt(jnp.mean(xf * xf, axis=-1, keepdims=True) + 1e-6)
    xn = xn.astype(x_ref.dtype)

    mod = xn.astype(jnp.float32) * (1.0 + scale) + shift
    out = jnp.dot(mod.astype(w_lin_ref.dtype), w_lin_ref[...],
                  preferred_element_type=jnp.float32)
    o_ref[0] = (out + b_lin_ref[...].astype(jnp.float32)).astype(o_ref.dtype)


@functools.partial(jax.jit, static_argnames=("out_channels", "token_tile"))
def final_layer(x, c, params, *, out_channels, token_tile=256):
    """FinalLayer forward.

    x: (B, T, C).  c: (B, T, C) per-token conditioning, or (B, C) per-sample DiT conditioning.
    params: output of prepare_params().  Returns (B, T, out_channels).
    """
    B, T, C = x.shape
    w_ada, b_ada = params["w_ada"], params["b_ada"]          # (C, 2C), (1, 2C)
    w_lin, b_lin = params["w_lin"], params["b_lin"]          # (C, out_Cp), (1, out_Cp)
    out_Cp = w_lin.shape[1]
    out_C = out_channels
    cap = _vmem_cap_bytes()
    itm = x.dtype.itemsize

    if c.ndim == 2:
        # --- Per-sample conditioning: hoist the adaLN matmul out of the token grid. ---
        cf = c.astype(jnp.float32)
        silu_c = (cf * jax.nn.sigmoid(cf)).astype(w_ada.dtype)
        ada = jnp.dot(silu_c, w_ada, preferred_element_type=jnp.float32)
        ada = (ada + b_ada.astype(jnp.float32)).astype(jnp.float32).reshape(B, 1, 2 * C)

        tt, vmem_limit = _fit_tile(
            token_tile, T,
            per_row_bytes=2 * C * itm + 2 * out_Cp * itm + (4 * C + 2 * out_Cp) * 4,
            fixed_bytes=2 * C * out_Cp * w_lin.dtype.itemsize + 2 * out_Cp * 4 + 2 * 2 * C * 4,
            cap=cap)

        out = pl.pallas_call(
            _final_layer_hoisted_kernel,
            out_shape=jax.ShapeDtypeStruct((B, T, out_Cp), x.dtype),
            grid=(B, pl.cdiv(T, tt)),
            in_specs=[
                pl.BlockSpec((1, tt, C), lambda b, t: (b, t, 0)),        # x tokens
                pl.BlockSpec((1, 1, 2 * C), lambda b, t: (b, 0, 0)),     # per-sample shift|scale
                pl.BlockSpec((C, out_Cp), lambda b, t: (0, 0)),          # final linear weight
                pl.BlockSpec((1, out_Cp), lambda b, t: (0, 0)),          # final linear bias
            ],
            out_specs=pl.BlockSpec((1, tt, out_Cp), lambda b, t: (b, t, 0)),
            compiler_params=pltpu.CompilerParams(
                dimension_semantics=("parallel", "parallel"),
                vmem_limit_bytes=vmem_limit),
        )(x, ada, w_lin, b_lin)
        if out_Cp != out_C:
            out = out[..., :out_C]
        return out

    # --- Per-token conditioning: fused adaLN matmul inside the kernel. ---
    N = B * T
    x2 = x.reshape(N, C)                                     # free reshapes, no copies
    c2 = c.reshape(N, C)

    tn, vmem_limit = _fit_tile(
        token_tile, N,
        per_row_bytes=2 * C * (itm + c.dtype.itemsize) + 2 * out_Cp * itm
                      + (6 * C + 2 * out_Cp) * 4,            # f32 ada/xf/mod/out intermediates
        fixed_bytes=2 * (2 * C * C + C * out_Cp) * w_ada.dtype.itemsize
                    + 2 * (2 * C + out_Cp) * 4,              # double-buffered resident weights
        cap=cap)

    out = pl.pallas_call(
        _final_layer_kernel,
        out_shape=jax.ShapeDtypeStruct((N, out_Cp), x.dtype),
        grid=(pl.cdiv(N, tn),),                              # ragged last block clipped by Pallas
        in_specs=[
            pl.BlockSpec((tn, C), lambda i: (i, 0)),         # x tokens
            pl.BlockSpec((tn, C), lambda i: (i, 0)),         # c tokens
            # Grid-invariant weights: constant index_map -> fetched once, kept resident.
            pl.BlockSpec((C, 2 * C), lambda i: (0, 0)),      # fused adaLN weight (shift|scale)
            pl.BlockSpec((1, 2 * C), lambda i: (0, 0)),      # fused adaLN bias
            pl.BlockSpec((C, out_Cp), lambda i: (0, 0)),     # final linear weight (lane-padded)
            pl.BlockSpec((1, out_Cp), lambda i: (0, 0)),     # final linear bias  (lane-padded)
        ],
        out_specs=pl.BlockSpec((tn, out_Cp), lambda i: (i, 0)),
        compiler_params=pltpu.CompilerParams(
            dimension_semantics=("parallel",),
            vmem_limit_bytes=vmem_limit),
    )(x2, c2, w_ada, b_ada, w_lin, b_lin)

    if out_Cp != out_C:
        out = out[:, :out_C]
    return out.reshape(B, T, out_C)


def prepare_params(params, compute_dtype=jnp.bfloat16):
    """One-time parameter prep (outside the per-call jitted path): lane-dense padding of the final
    linear to a multiple of 128, (1, 2C) bias layout, and bf16 weight storage for the MXU."""
    C = params["w_ada"].shape[0]
    out_C = params["w_lin"].shape[1]
    out_Cp = _round_up(out_C, 128)
    w_lin, b_lin = params["w_lin"], params["b_lin"]
    if out_Cp != out_C:
        w_lin = jnp.pad(w_lin, ((0, 0), (0, out_Cp - out_C)))
        b_lin = jnp.pad(b_lin, ((0, out_Cp - out_C),))
    return {
        "w_ada": params["w_ada"].astype(compute_dtype),                 # (C, 2C)
        "b_ada": params["b_ada"].reshape(1, 2 * C).astype(jnp.float32),
        "w_lin": w_lin.astype(compute_dtype),                           # (C, out_Cp)
        "b_lin": b_lin.reshape(1, out_Cp).astype(jnp.float32),
    }


def init_params(key, model_channels, out_channels, dtype=jnp.float32):
    """Deterministic synthetic parameters (shapes match the PyTorch module, stored as (in, out))."""
    k1, k2, k3, k4 = jax.random.split(key, 4)
    s = 1.0 / jnp.sqrt(model_channels)
    return {
        "w_ada": (jax.random.normal(k1, (model_channels, 2 * model_channels)) * s).astype(dtype),
        "b_ada": (jax.random.normal(k2, (2 * model_channels,)) * 0.01).astype(dtype),
        "w_lin": (jax.random.normal(k3, (model_channels, out_channels)) * s).astype(dtype),
        "b_lin": (jax.random.normal(k4, (out_channels,)) * 0.01).astype(dtype),
    }


def _reference(x, c, params):
    """Plain-JAX reference mirroring the PyTorch forward (high-precision dots)."""
    C = x.shape[-1]
    hp = jax.lax.Precision.HIGHEST
    silu_c = c * jax.nn.sigmoid(c)
    ada = jnp.dot(silu_c, params["w_ada"], precision=hp) + params["b_ada"]
    shift, scale = ada[..., :C], ada[..., C:]
    if c.ndim == x.ndim - 1:                 # per-sample conditioning broadcast over tokens
        shift, scale = shift[:, None, :], scale[:, None, :]
    xf = x.astype(jnp.float32)
    xn = xf * jax.lax.rsqrt(jnp.mean(xf * xf, axis=-1, keepdims=True) + 1e-6)
    xn = xn.astype(x.dtype)
    mod = xn * (1 + scale) + shift
    return jnp.dot(mod, params["w_lin"], precision=hp) + params["b_lin"]


if __name__ == "__main__":
    key = jax.random.PRNGKey(0)
    B, T, C, out_C = 2, 64, 128, 32

    kx, kc, kp = jax.random.split(key, 3)
    x = jax.random.normal(kx, (B, T, C), dtype=jnp.float32)
    c = jax.random.normal(kc, (B, T, C), dtype=jnp.float32)
    params = init_params(kp, C, out_C)

    # 1) f32 weights: tight-tolerance check of the kernel plumbing against the PyTorch-semantics ref.
    p32 = prepare_params(params, compute_dtype=jnp.float32)
    out32 = jax.block_until_ready(final_layer(x, c, p32, out_channels=out_C, token_tile=128))
    ref32 = _reference(x, c, params)
    assert out32.shape == (B, T, out_C), out32.shape
    assert jnp.allclose(out32, ref32, atol=1e-3, rtol=1e-3), float(jnp.max(jnp.abs(out32 - ref32)))

    # 2) Default bf16 weights (fast MXU path); reference uses the same bf16-rounded weights.
    pbf = prepare_params(params)
    params_bf = {k: (v.astype(jnp.bfloat16).astype(jnp.float32) if k.startswith("w") else v)
                 for k, v in params.items()}
    outbf = jax.block_until_ready(final_layer(x, c, pbf, out_channels=out_C))
    refbf = _reference(x, c, params_bf)
    assert jnp.allclose(outbf, refbf, atol=5e-2, rtol=5e-2), float(jnp.max(jnp.abs(outbf - refbf)))

    # 3) Per-sample conditioning: adaLN matmul hoisted out of the token grid.
    c_sample = jax.random.normal(jax.random.PRNGKey(1), (B, C), dtype=jnp.float32)
    outps = jax.block_until_ready(final_layer(x, c_sample, pbf, out_channels=out_C))
    refps = _reference(x, c_sample, params_bf)
    assert outps.shape == (B, T, out_C), outps.shape
    assert jnp.allclose(outps, refps, atol=5e-2, rtol=5e-2), float(jnp.max(jnp.abs(outps - refps)))

    print("KERNEL_OK")
</pallas_src>

<mosaic_0001>
module attributes {stable_mosaic.version = 11 : i64} {
  func.func @_final_layer_kernel(%arg0: i32, %arg1: memref<64x128xf32, #tpu.memory_space<vmem>>, %arg2: memref<64x128xf32, #tpu.memory_space<vmem>>, %arg3: memref<128x256xf32, #tpu.memory_space<vmem>>, %arg4: memref<1x256xf32, #tpu.memory_space<vmem>>, %arg5: memref<128x128xf32, #tpu.memory_space<vmem>>, %arg6: memref<1x128xf32, #tpu.memory_space<vmem>>, %arg7: memref<64x128xf32, #tpu.memory_space<vmem>>) attributes {dimension_semantics = [#tpu.dimension_semantics<parallel>], iteration_bounds = array<i64: 2>, scalar_prefetch = 0 : i64, scratch_operands = 0 : i64, tpu.core_type = #tpu.core_type<tc>, window_params = [{transform_indices = @transform_0, window_bounds = array<i64: 64, 128>}, {transform_indices = @transform_1, window_bounds = array<i64: 64, 128>}, {pipeline_mode = #tpu.pipeline_mode<synchronous>, transform_indices = @transform_2, window_bounds = array<i64: 128, 256>}, {pipeline_mode = #tpu.pipeline_mode<synchronous>, transform_indices = @transform_3, window_bounds = array<i64: 1, 256>}, {pipeline_mode = #tpu.pipeline_mode<synchronous>, transform_indices = @transform_4, window_bounds = array<i64: 128, 128>}, {pipeline_mode = #tpu.pipeline_mode<synchronous>, transform_indices = @transform_5, window_bounds = array<i64: 1, 128>}, {transform_indices = @transform_6, window_bounds = array<i64: 64, 128>}]} {
    %c0 = arith.constant 0 : index
    %c0_0 = arith.constant 0 : index
    %0 = vector.load %arg2[%c0, %c0_0] : memref<64x128xf32, #tpu.memory_space<vmem>>, vector<64x128xf32>
    %1 = arith.negf %0 : vector<64x128xf32>
    %2 = math.exp %1 : vector<64x128xf32>
    %cst = arith.constant 1.000000e+00 : f32
    %3 = vector.broadcast %cst : f32 to vector<64x128xf32>
    %4 = arith.addf %3, %2 : vector<64x128xf32>
    %5 = arith.divf %3, %4 : vector<64x128xf32>
    %6 = arith.mulf %0, %5 : vector<64x128xf32>
    %c0_1 = arith.constant 0 : index
    %c0_2 = arith.constant 0 : index
    %7 = vector.load %arg3[%c0_1, %c0_2] : memref<128x256xf32, #tpu.memory_space<vmem>>, vector<128x256xf32>
    %cst_3 = arith.constant dense<0.000000e+00> : vector<64x256xf32>
    %8 = tpu.matmul %6, %7, %cst_3 {dimension_numbers = #tpu.dot_dimension_numbers<[1], [0], [0], [1], [0, 0, 1, 1], [], []>} : vector<64x128xf32>, vector<128x256xf32>, vector<64x256xf32> -> vector<64x256xf32>
    %c0_4 = arith.constant 0 : index
    %c0_5 = arith.constant 0 : index
    %9 = vector.load %arg4[%c0_4, %c0_5] : memref<1x256xf32, #tpu.memory_space<vmem>>, vector<1x256xf32>
    %10 = vector.broadcast %9 : vector<1x256xf32> to vector<64x256xf32>
    %11 = arith.addf %8, %10 : vector<64x256xf32>
    %12 = vector.extract_strided_slice %11 {offsets = [0, 0], sizes = [64, 128], strides = [1, 1]} : vector<64x256xf32> to vector<64x128xf32>
    %13 = vector.extract_strided_slice %11 {offsets = [0, 128], sizes = [64, 128], strides = [1, 1]} : vector<64x256xf32> to vector<64x128xf32>
    %c0_6 = arith.constant 0 : index
    %c0_7 = arith.constant 0 : index
    %14 = vector.load %arg1[%c0_6, %c0_7] : memref<64x128xf32, #tpu.memory_space<vmem>>, vector<64x128xf32>
    %15 = arith.mulf %14, %14 : vector<64x128xf32>
    %cst_8 = arith.constant dense<0.000000e+00> : vector<64xf32>
    %16 = vector.multi_reduction <add>, %15, %cst_8 [1] : vector<64x128xf32> to vector<64xf32>
    %17 = vector.shape_cast %16 : vector<64xf32> to vector<64x1xf32>
    %cst_9 = arith.constant 1.280000e+02 : f32
    %18 = vector.broadcast %cst_9 : f32 to vector<64x1xf32>
    %19 = arith.divf %17, %18 : vector<64x1xf32>
    %cst_10 = arith.constant 9.99999997E-7 : f32
    %20 = vector.broadcast %cst_10 : f32 to vector<64x1xf32>
    %21 = arith.addf %19, %20 : vector<64x1xf32>
    %22 = math.rsqrt %21 : vector<64x1xf32>
    %23 = vector.broadcast %22 : vector<64x1xf32> to vector<64x128xf32>
    %24 = arith.mulf %14, %23 : vector<64x128xf32>
    %cst_11 = arith.constant 1.000000e+00 : f32
    %25 = vector.broadcast %cst_11 : f32 to vector<64x128xf32>
    %26 = arith.addf %25, %13 : vector<64x128xf32>
    %27 = arith.mulf %24, %26 : vector<64x128xf32>
    %28 = arith.addf %27, %12 : vector<64x128xf32>
    %c0_12 = arith.constant 0 : index
    %c0_13 = arith.constant 0 : index
    %29 = vector.load %arg5[%c0_12, %c0_13] : memref<128x128xf32, #tpu.memory_space<vmem>>, vector<128x128xf32>
    %cst_14 = arith.constant dense<0.000000e+00> : vector<64x128xf32>
    %30 = tpu.matmul %28, %29, %cst_14 {dimension_numbers = #tpu.dot_dimension_numbers<[1], [0], [0], [1], [0, 0, 1, 1], [], []>} : vector<64x128xf32>, vector<128x128xf32>, vector<64x128xf32> -> vector<64x128xf32>
    %c0_15 = arith.constant 0 : index
    %c0_16 = arith.constant 0 : index
    %31 = vector.load %arg6[%c0_15, %c0_16] : memref<1x128xf32, #tpu.memory_space<vmem>>, vector<1x128xf32>
    %32 = vector.broadcast %31 : vector<1x128xf32> to vector<64x128xf32>
    %33 = arith.addf %30, %32 : vector<64x128xf32>
    %c0_17 = arith.constant 0 : index
    %c0_18 = arith.constant 0 : index
    %34 = vector.load %arg7[%c0_17, %c0_18] : memref<64x128xf32, #tpu.memory_space<vmem>>, vector<64x128xf32>
    tpu.vector_store %arg7[%c0_17, %c0_18], %33 {strides = array<i32>} : memref<64x128xf32, #tpu.memory_space<vmem>>, vector<64x128xf32>,
    return
  }
  func.func @transform_0(%arg0: i32) -> (i32, i32) {
    %c0_i32 = arith.constant 0 : i32
    %c0_i32_0 = arith.constant 0 : i32
    return %arg0, %c0_i32 : i32, i32
  }
  func.func @transform_1(%arg0: i32) -> (i32, i32) {
    %c0_i32 = arith.constant 0 : i32
    %c0_i32_0 = arith.constant 0 : i32
    return %arg0, %c0_i32 : i32, i32
  }
  func.func @transform_2(%arg0: i32) -> (i32, i32) {
    %c0_i32 = arith.constant 0 : i32
    %c0_i32_0 = arith.constant 0 : i32
    %c0_i32_1 = arith.constant 0 : i32
    return %c0_i32, %c0_i32_0 : i32, i32
  }
  func.func @transform_3(%arg0: i32) -> (i32, i32) {
    %c0_i32 = arith.constant 0 : i32
    %c0_i32_0 = arith.constant 0 : i32
    %c0_i32_1 = arith.constant 0 : i32
    return %c0_i32, %c0_i32_0 : i32, i32
  }
  func.func @transform_4(%arg0: i32) -> (i32, i32) {
    %c0_i32 = arith.constant 0 : i32
    %c0_i32_0 = arith.constant 0 : i32
    %c0_i32_1 = arith.constant 0 : i32
    return %c0_i32, %c0_i32_0 : i32, i32
  }
  func.func @transform_5(%arg0: i32) -> (i32, i32) {
    %c0_i32 = arith.constant 0 : i32
    %c0_i32_0 = arith.constant 0 : i32
    %c0_i32_1 = arith.constant 0 : i32
    return %c0_i32, %c0_i32_0 : i32, i32
  }
  func.func @transform_6(%arg0: i32) -> (i32, i32) {
    %c0_i32 = arith.constant 0 : i32
    %c0_i32_0 = arith.constant 0 : i32
    return %arg0, %c0_i32 : i32, i32
  }
}

</mosaic_0001>

<llo_original>
// kernel: final_layer.1
$region0: #{final_layer.1}
  #allocation0 [shape = 'u32[]', space=smem, size = 0x4, offset = 0x4, fixed_abs, tag = 'smem constant byte address 0x4 - core index']
  #allocation1 [shape = 'u32[144,128]{1,0:T(1,128)}', space=vmem, size = 0x12000, scoped, tag = 'internal scratch']
  %s0 = inlined_call_operand.hbm [shape: f32[128,128], index: 0, kind: input, shape index: {}]
  %s1 = inlined_call_operand.hbm [shape: f32[128,128], index: 1, kind: input, shape index: {}]
  %s2 = inlined_call_operand.hbm [shape: f32[128,256], index: 2, kind: input, shape index: {}]
  %s3 = inlined_call_operand.vmem [shape: f32[1,256], index: 3, kind: input, shape index: {}]
  %s4 = inlined_call_operand.hbm [shape: f32[128,128], index: 4, kind: input, shape index: {}]
  %s5 = inlined_call_operand.vmem [shape: f32[1,128], index: 5, kind: input, shape index: {}]
  %s6 = inlined_call_operand.vmem [shape: f32[128,128], index: 6, kind: output, shape index: {}]
  %s7 = sld [smem:[#allocation0]]
  $region73: #{final_layer.1} parent=0
    _
  %s9 = ssub.s32 1, %s7
  %s10 = scalar_select 0, %s9, %s7
  $region1: #{final_layer.1} parent=0
    #allocation2 [shape = 'u8[65536]{0}', space=vmem, size = 0x10000, scoped, tag = 'input window, operand 0']
    #allocation3 [shape = 's32[2]{0}', space=sflag, size = 0x8, scoped, tag = 'scoped memory for final_layer.1']
    #allocation4 [shape = 'u8[65536]{0}', space=vmem, size = 0x10000, scoped, tag = 'input window, operand 1']
    #allocation5 [shape = 's32[2]{0}', space=sflag, size = 0x8, scoped, tag = 'scoped memory for final_layer.1']
    #allocation6 [shape = 'u8[131072]{0}', space=vmem, size = 0x20000, scoped, tag = 'input window, operand 2, single buffered']
    #allocation7 [shape = 'u8[65536]{0}', space=vmem, size = 0x10000, scoped, tag = 'input window, operand 4, single buffered']
    #allocation8 [shape = 's32[1]{0}', space=sflag, size = 0x4, scoped, tag = 'scoped memory for final_layer.1']
    %11 = vsyncpa [#allocation3], 0
    %s12 = scalar_lea.sflag [#allocation3], 1
    %13 = vsyncpa %s12, 0
    %14 = vsyncpa [#allocation5], 0
    %s15 = scalar_lea.sflag [#allocation5], 1
    %16 = vsyncpa %s15, 0
    %17 = vsyncpa [#allocation8], 0
    loop: start=0, step=1, limit=4
    $region2: #{final_layer.1} parent=1 // loop_pre_header
      _
    $region3: #{final_layer.1} parent=1 // loop_header
      %s19 = sphi 0, %s23
      %p20 = scmp.ge.s32.totalorder %s19, 4
      %s29 = sphi 0, %s31
      %s32 = sphi 0, %s29
      %s33 = sphi 0, %s32
      %s49 = sphi 0, %s33
      %s55 = sphi 0, %s57
      %s58 = sphi 0, %s55
      %s59 = sphi 0, %s58
      %s75 = sphi 0, %s59
      %s79 = sphi 0, %s79
      %s81 = sphi 0, %s79
      %s82 = sphi 0, %s81
      %s96 = sphi 0, %s82
      %s100 = sphi 0, %s100
      %s102 = sphi 0, %s100
      %s103 = sphi 0, %s102
      %s117 = sphi 0, %s103
      %s121 = sphi 0, %s121
      %s123 = sphi 0, %s121
      %s124 = sphi 0, %s123
      %s138 = sphi 0, %s124
      %s142 = sphi 0, %s142
      %s144 = sphi 0, %s142
      %s145 = sphi 0, %s144
      %s159 = sphi 0, %s145
      %s165 = sphi 0, %s167
      %s168 = sphi 0, %s165
      %s169 = sphi 0, %s168
      %s185 = sphi 0, %s169
    $region4: #{final_layer.1} parent=1 // loop_header_branch
      %22 = sbr.rel (%p20) target = $region8
    $region5: #{final_layer.1} parent=1 // loop_body
      %s24 = ssub.s32 %s19, 1
      %s25 = ssub.s32 %s19, 2
      %s26 = sadd.s32 %s19, 1
      %s27 = ssub.s32 %s19, %s26
      %p28 = scmp.eq.s32.totalorder %s27, 0
      %s30 = sadd.s32 %s29, 1
      %s31 = scalar_select %p28, %s29, %s30
      %p34 = pneg %p28
      %p35 = scmp.eq.s32.totalorder %s19, 1
      %p36 = por %p34, %p35
      %p37 = scmp.ne.s32.totalorder %s29, %s32
      %p38 = scmp.eq.s32.totalorder %s19, 0
      %p39 = por %p37, %p38
      %p40 = scmp.ne.s32.totalorder %s29, %s32
      %p41 = scmp.eq.s32.totalorder %s24, 1
      %p42 = por %p40, %p41
      %p43 = scmp.ne.s32.totalorder %s32, %s33
      %p44 = scmp.eq.s32.totalorder %s24, 0
      %p45 = por %p43, %p44
      %p46 = scmp.ne.s32.totalorder %s32, %s33
      %p47 = scmp.eq.s32.totalorder %s25, 1
      %p48 = por %p46, %p47
      %p50 = scmp.ne.s32.totalorder %s33, %s49
      %p51 = scmp.eq.s32.totalorder %s25, 0
      %p52 = por %p50, %p51
      %s53 = ssub.s32 %s19, %s26
      %p54 = scmp.eq.s32.totalorder %s53, 0
      %s56 = sadd.s32 %s55, 1
      %s57 = scalar_select %p54, %s55, %s56
      %p60 = pneg %p54
      %p61 = scmp.eq.s32.totalorder %s19, 1
      %p62 = por %p60, %p61
      %p63 = scmp.ne.s32.totalorder %s55, %s58
      %p64 = scmp.eq.s32.totalorder %s19, 0
      %p65 = por %p63, %p64
      %p66 = scmp.ne.s32.totalorder %s55, %s58
      %p67 = scmp.eq.s32.totalorder %s24, 1
      %p68 = por %p66, %p67
      %p69 = scmp.ne.s32.totalorder %s58, %s59
      %p70 = scmp.eq.s32.totalorder %s24, 0
      %p71 = por %p69, %p70
      %p72 = scmp.ne.s32.totalorder %s58, %s59
      %p73 = scmp.eq.s32.totalorder %s25, 1
      %p74 = por %p72, %p73
      %p76 = scmp.ne.s32.totalorder %s59, %s75
      %p77 = scmp.eq.s32.totalorder %s25, 0
      %p78 = por %p76, %p77
      %s80 = sadd.s32 %s79, 1
      %p83 = scmp.eq.s32.totalorder %s19, 1
      %p84 = scmp.ne.s32.totalorder %s79, %s81
      %p85 = scmp.eq.s32.totalorder %s19, 0
      %p86 = por %p84, %p85
      %p87 = scmp.ne.s32.totalorder %s79, %s81
      %p88 = scmp.eq.s32.totalorder %s24, 1
      %p89 = por %p87, %p88
      %p90 = scmp.ne.s32.totalorder %s81, %s82
      %p91 = scmp.eq.s32.totalorder %s24, 0
      %p92 = por %p90, %p91
      %p93 = scmp.ne.s32.totalorder %s81, %s82
      %p94 = scmp.eq.s32.totalorder %s25, 1
      %p95 = por %p93, %p94
      %p97 = scmp.ne.s32.totalorder %s82, %s96
      %p98 = scmp.eq.s32.totalorder %s25, 0
      %p99 = por %p97, %p98
      %s101 = sadd.s32 %s100, 1
      %p104 = scmp.eq.s32.totalorder %s19, 1
      %p105 = scmp.ne.s32.totalorder %s100, %s102
      %p106 = scmp.eq.s32.totalorder %s19, 0
      %p107 = por %p105, %p106
      %p108 = scmp.ne.s32.totalorder %s100, %s102
      %p109 = scmp.eq.s32.totalorder %s24, 1
      %p110 = por %p108, %p109
      %p111 = scmp.ne.s32.totalorder %s102, %s103
      %p112 = scmp.eq.s32.totalorder %s24, 0
      %p113 = por %p111, %p112
      %p114 = scmp.ne.s32.totalorder %s102, %s103
      %p115 = scmp.eq.s32.totalorder %s25, 1
      %p116 = por %p114, %p115
      %p118 = scmp.ne.s32.totalorder %s103, %s117
      %p119 = scmp.eq.s32.totalorder %s25, 0
      %p120 = por %p118, %p119
      %s122 = sadd.s32 %s121, 1
      %p125 = scmp.eq.s32.totalorder %s19, 1
      %p126 = scmp.ne.s32.totalorder %s121, %s123
      %p127 = scmp.eq.s32.totalorder %s19, 0
      %p128 = por %p126, %p127
      %p129 = scmp.ne.s32.totalorder %s121, %s123
      %p130 = scmp.eq.s32.totalorder %s24, 1
      %p131 = por %p129, %p130
      %p132 = scmp.ne.s32.totalorder %s123, %s124
      %p133 = scmp.eq.s32.totalorder %s24, 0
      %p134 = por %p132, %p133
      %p135 = scmp.ne.s32.totalorder %s123, %s124
      %p136 = scmp.eq.s32.totalorder %s25, 1
      %p137 = por %p135, %p136
      %p139 = scmp.ne.s32.totalorder %s124, %s138
      %p140 = scmp.eq.s32.totalorder %s25, 0
      %p141 = por %p139, %p140
      %s143 = sadd.s32 %s142, 1
      %p146 = scmp.eq.s32.totalorder %s19, 1
      %p147 = scmp.ne.s32.totalorder %s142, %s144
      %p148 = scmp.eq.s32.totalorder %s19, 0
      %p149 = por %p147, %p148
      %p150 = scmp.ne.s32.totalorder %s142, %s144
      %p151 = scmp.eq.s32.totalorder %s24, 1
      %p152 = por %p150, %p151
      %p153 = scmp.ne.s32.totalorder %s144, %s145
      %p154 = scmp.eq.s32.totalorder %s24, 0
      %p155 = por %p153, %p154
      %p156 = scmp.ne.s32.totalorder %s144, %s145
      %p157 = scmp.eq.s32.totalorder %s25, 1
      %p158 = por %p156, %p157
      %p160 = scmp.ne.s32.totalorder %s145, %s159
      %p161 = scmp.eq.s32.totalorder %s25, 0
      %p162 = por %p160, %p161
      %s163 = ssub.s32 %s19, %s26
      %p164 = scmp.eq.s32.totalorder %s163, 0
      %s166 = sadd.s32 %s165, 1
      %s167 = scalar_select %p164, %s165, %s166
      %p170 = pneg %p164
      %p171 = scmp.eq.s32.totalorder %s19, 1
      %p172 = por %p170, %p171
      %p173 = scmp.ne.s32.totalorder %s165, %s168
      %p174 = scmp.eq.s32.totalorder %s19, 0
      %p175 = por %p173, %p174
      %p176 = scmp.ne.s32.totalorder %s165, %s168
      %p177 = scmp.eq.s32.totalorder %s24, 1
      %p178 = por %p176, %p177
      %p179 = scmp.ne.s32.totalorder %s168, %s169
      %p180 = scmp.eq.s32.totalorder %s24, 0
      %p181 = por %p179, %p180
      %p182 = scmp.ne.s32.totalorder %s168, %s169
      %p183 = scmp.eq.s32.totalorder %s25, 1
      %p184 = por %p182, %p183
      %p186 = scmp.ne.s32.totalorder %s169, %s185
      %p187 = scmp.eq.s32.totalorder %s25, 0
      %p188 = por %p186, %p187
      %p189 = scmp.le.s32.totalorder 1, %s19
      %p190 = scmp.lt.s32.totalorder %s19, 3
      %p191 = pnand %p189, %p190
      %p192 = pneg %p191
      // Predicated region
      $region9: #{final_layer.1} parent=5 // pred_check
        _
      $region10: #{final_layer.1} parent=5 // pred_check_branch
        %194 = sbr.rel (%p191) target = $region12
      $region11: #{final_layer.1} parent=5 // pred_region
        %s195 = ssub.s32 %s19, 1
        // Predicated region
        $region13: #{final_layer.1} parent=11 // pred_check
          %p196 = pneg %p92
        $region14: #{final_layer.1} parent=11 // pred_check_branch
          %198 = sbr.rel (%p196) target = $region16
        $region15: #{final_layer.1} parent=11 // pred_region
          %s200 = ssub.s32 4096, 4096
          %201 = vsyncadd [#allocation5], %s200
          %s202 = sshll.u32 [#allocation6], 4
          %s203 = int_to_ptr.vmem [resolvable:$true] %s202
          %208 = dma.hbm_to_vmem [thread:$0]  %s2, 4096, %s203, [#allocation5], 256, 256, 16
        $region16: #{final_layer.1} parent=11 // pred_fallthru
          _
        // Predicated region
        $region17: #{final_layer.1} parent=11 // pred_check
          %p209 = pneg %p113
        $region18: #{final_layer.1} parent=11 // pred_check_branch
          %211 = sbr.rel (%p209) target = $region20
        $region19: #{final_layer.1} parent=11 // pred_region
          _
        $region20: #{final_layer.1} parent=11 // pred_fallthru
          _
        // Predicated region
        $region21: #{final_layer.1} parent=11 // pred_check
          %p212 = pneg %p134
        $region22: #{final_layer.1} parent=11 // pred_check_branch
          %214 = sbr.rel (%p212) target = $region24
        $region23: #{final_layer.1} parent=11 // pred_region
          %s216 = ssub.s32 2048, 2048
          %217 = vsyncadd [#allocation8], %s216
          %s218 = sshll.u32 [#allocation7], 4
          %s219 = int_to_ptr.vmem [resolvable:$true] %s218
          %224 = dma.hbm_to_vmem [thread:$0]  %s4, 2048, %s219, [#allocation8], 128, 128, 8
        $region24: #{final_layer.1} parent=11 // pred_fallthru
          _
        // Predicated region
        $region25: #{final_layer.1} parent=11 // pred_check
          %p225 = pneg %p155
        $region26: #{final_layer.1} parent=11 // pred_check_branch
          %227 = sbr.rel (%p225) target = $region28
        $region27: #{final_layer.1} parent=11 // pred_region
          _
        $region28: #{final_layer.1} parent=11 // pred_fallthru
          _
      $region12: #{final_layer.1} parent=5 // pred_fallthru
        _
      %p228 = scmp.lt.s32.totalorder %s19, 2
      // Predicated region
      $region29: #{final_layer.1} parent=5 // pred_check
        %p229 = pneg %p228
      $region30: #{final_layer.1} parent=5 // pred_check_branch
        %231 = sbr.rel (%p229) target = $region32
      $region31: #{final_layer.1} parent=5 // pred_region
        // Predicated region
        $region33: #{final_layer.1} parent=31 // pred_check
          %p232 = pneg %p39
        $region34: #{final_layer.1} parent=31 // pred_check_branch
          %234 = sbr.rel (%p232) target = $region36
        $region35: #{final_layer.1} parent=31 // pred_region
          %s235 = sand.u32 %s29, 1
          %s236 = scalar_lea.sflag [#allocation3], %s235
          %s237 = sand.u32 %s29, 1
          %s238 = smul.addr %s237, 64
          %s239 = scalar_lea.vmem [#allocation2], %s238
          %s240 = smul.u32 8, %s19
          %s242 = ssub.s32 1024, 1024
          %243 = vsyncadd %s236, %s242
          %s244 = smul.addr %s240, 128
          %s245 = scalar_lea.hbm %s0, %s244
          %s246 = sshll.u32 %s239, 4
          %s247 = int_to_ptr.vmem [resolvable:$true] %s246
          %252 = dma.hbm_to_vmem [thread:$0]  %s245, 1024, %s247, %s236, 128, 128, 8
        $region36: #{final_layer.1} parent=31 // pred_fallthru
          _
        // Predicated region
        $region37: #{final_layer.1} parent=31 // pred_check
          %p253 = pneg %p65
        $region38: #{final_layer.1} parent=31 // pred_check_branch
          %255 = sbr.rel (%p253) target = $region40
        $region39: #{final_layer.1} parent=31 // pred_region
          %s256 = sand.u32 %s19, 1
          %s257 = scalar_lea.sflag [#allocation5], %s256
          %s258 = sand.u32 %s55, 1
          %s259 = smul.addr %s258, 64
          %s260 = scalar_lea.vmem [#allocation4], %s259
          %s261 = smul.u32 8, %s19
          %s263 = ssub.s32 1024, 1024
          %264 = vsyncadd %s257, %s263
          %s265 = smul.addr %s261, 128
          %s266 = scalar_lea.hbm %s1, %s265
          %s267 = sshll.u32 %s260, 4
          %s268 = int_to_ptr.vmem [resolvable:$true] %s267
          %273 = dma.hbm_to_vmem [thread:$0]  %s266, 1024, %s268, %s257, 128, 128, 8
        $region40: #{final_layer.1} parent=31 // pred_fallthru
          _
      $region32: #{final_layer.1} parent=5 // pred_fallthru
        _
      %p274 = scmp.le.s32.totalorder 1, %s19
      %p275 = scmp.lt.s32.totalorder %s19, 3
      %p276 = pnand %p274, %p275
      %p277 = pneg %p276
      // Predicated region
      $region41: #{final_layer.1} parent=5 // pred_check
        _
      $region42: #{final_layer.1} parent=5 // pred_check_branch
        %279 = sbr.rel (%p276) target = $region44
      $region43: #{final_layer.1} parent=5 // pred_region
        %s280 = ssub.s32 %s19, 1
        %s281 = sand.u32 %s32, 1
        %s282 = scalar_lea.sflag [#allocation3], %s281
        %s283 = sand.u32 %s32, 1
        %s284 = smul.addr %s283, 64
        %s285 = scalar_lea.vmem [#allocation2], %s284
        // Predicated region
        $region45: #{final_layer.1} parent=43 // pred_check
          %p286 = pneg %p45
        $region46: #{final_layer.1} parent=43 // pred_check_branch
          %288 = sbr.rel (%p286) target = $region48
        $region47: #{final_layer.1} parent=43 // pred_region
          %289 = dma.done %s282, 1024
        $region48: #{final_layer.1} parent=43 // pred_fallthru
          _
        %s290 = sand.u32 %s24, 1
        %s291 = scalar_lea.sflag [#allocation5], %s290
        %s292 = sand.u32 %s58, 1
        %s293 = smul.addr %s292, 64
        %s294 = scalar_lea.vmem [#allocation4], %s293
        // Predicated region
        $region49: #{final_layer.1} parent=43 // pred_check
          %p295 = pneg %p71
        $region50: #{final_layer.1} parent=43 // pred_check_branch
          %297 = sbr.rel (%p295) target = $region52
        $region51: #{final_layer.1} parent=43 // pred_region
          %298 = dma.done %s291, 1024
        $region52: #{final_layer.1} parent=43 // pred_fallthru
          _
        // Predicated region
        $region53: #{final_layer.1} parent=43 // pred_check
          %p299 = pneg %p92
        $region54: #{final_layer.1} parent=43 // pred_check_branch
          %301 = sbr.rel (%p299) target = $region56
        $region55: #{final_layer.1} parent=43 // pred_region
          %302 = dma.done [#allocation5], 4096
        $region56: #{final_layer.1} parent=43 // pred_fallthru
          _
        // Predicated region
        $region57: #{final_layer.1} parent=43 // pred_check
          %p303 = pneg %p134
        $region58: #{final_layer.1} parent=43 // pred_check_branch
          %305 = sbr.rel (%p303) target = $region60
        $region59: #{final_layer.1} parent=43 // pred_region
          %306 = dma.done [#allocation8], 2048
        $region60: #{final_layer.1} parent=43 // pred_fallthru
          _
        %s307 = sand.u32 %s32, 1
        %s308 = scalar_lea.sflag [#allocation3], %s307
        %s309 = sand.u32 %s32, 1
        %s310 = smul.addr %s309, 64
        %s311 = scalar_lea.vmem [#allocation2], %s310
        %p312 = pneg %p45
        %p313 = pneg %p42
        %s314 = sand.u32 %s24, 1
        %s315 = scalar_lea.sflag [#allocation5], %s314
        %s316 = sand.u32 %s58, 1
        %s317 = smul.addr %s316, 64
        %s318 = scalar_lea.vmem [#allocation4], %s317
        %p319 = pneg %p71
        %p320 = pneg %p68
        %p321 = pneg %p92
        %p322 = pneg %p89
        %p323 = pneg %p113
        %p324 = pneg %p110
        %p325 = pneg %p134
        %p326 = pneg %p131
        %p327 = pneg %p155
        %p328 = pneg %p152
        %p329 = pneg %p181
        %p330 = pneg %p178
        %s331 = smul.u32 8, %s24
        %p332 = scmp.lt.s32.totalorder %s331, 15
        %s333 = scalar_select %p332, %s331, 15
        %s334 = smul.addr %s333, 8
        %s335 = scalar_lea.vmem %s6, %s334
        %s336 = smul.u32 8, %s24
        %s337 = smul.u32 8, %s24
        %s338 = smul.u32 8, %s24
        %p339 = scmp.lt.s32.totalorder %s338, 15
        %s340 = scalar_select %p339, %s338, 15
        %s341 = smul.addr %s340, 8
        %s342 = scalar_lea.vmem %s6, %s341
        %s343 = smul.u32 8, %s24
        %v344 = vld [vmem:[%s294] sm:$0xff]
        %v345 = vld [vmem:[%s294 + $0x8] sm:$0xff]
        %v346 = vld [vmem:[%s294 + $0x10] sm:$0xff]
        %v347 = vld [vmem:[%s294 + $0x18] sm:$0xff]
        %v348 = vld [vmem:[%s294 + $0x20] sm:$0xff]
        %v349 = vld [vmem:[%s294 + $0x28] sm:$0xff]
        %v350 = vld [vmem:[%s294 + $0x30] sm:$0xff]
        %v351 = vld [vmem:[%s294 + $0x38] sm:$0xff]
        %v352 = vxor.u32 %v344, 2147483648
        %v353 = vxor.u32 %v345, 2147483648
        %v354 = vxor.u32 %v346, 2147483648
        %v355 = vxor.u32 %v347, 2147483648
        %v356 = vxor.u32 %v348, 2147483648
        %v357 = vxor.u32 %v349, 2147483648
        %v358 = vxor.u32 %v350, 2147483648
        %v359 = vxor.u32 %v351, 2147483648
        %v360 = vmul.f32 %v352, 1.442695
        %v361 = vpow.pop %v360
        %v362 = vmul.f32 %v353, 1.442695
        %v363 = vpow.pop %v362
        %v364 = vmul.f32 %v354, 1.442695
        %v365 = vpow.pop %v364
        %v366 = vmul.f32 %v355, 1.442695
        %v367 = vpow.pop %v366
        %v368 = vmul.f32 %v356, 1.442695
        %v369 = vpow.pop %v368
        %v370 = vmul.f32 %v357, 1.442695
        %v371 = vpow.pop %v370
        %v372 = vmul.f32 %v358, 1.442695
        %v373 = vpow.pop %v372
        %v374 = vmul.f32 %v359, 1.442695
        %v375 = vpow.pop %v374
        %v376 = vadd.f32 %v361, 1.0
        %v377 = vadd.f32 %v363, 1.0
        %v378 = vadd.f32 %v365, 1.0
        %v379 = vadd.f32 %v367, 1.0
        %v380 = vadd.f32 %v369, 1.0
        %v381 = vadd.f32 %v371, 1.0
        %v382 = vadd.f32 %v373, 1.0
        %v383 = vadd.f32 %v375, 1.0
        %v384 = vrcp.pop %v376
        %v385 = vmul.f32 1.0, %v384
        %v386 = vrcp.pop %v377
        %v387 = vmul.f32 1.0, %v386
        %v388 = vrcp.pop %v378
        %v389 = vmul.f32 1.0, %v388
        %v390 = vrcp.pop %v379
        %v391 = vmul.f32 1.0, %v390
        %v392 = vrcp.pop %v380
        %v393 = vmul.f32 1.0, %v392
        %v394 = vrcp.pop %v381
        %v395 = vmul.f32 1.0, %v394
        %v396 = vrcp.pop %v382
        %v397 = vmul.f32 1.0, %v396
        %v398 = vrcp.pop %v383
        %v399 = vmul.f32 1.0, %v398
        %v400 = vmul.f32 %v344, %v385
        %v401 = vmul.f32 %v345, %v387
        %v402 = vmul.f32 %v346, %v389
        %v403 = vmul.f32 %v347, %v391
        %v404 = vmul.f32 %v348, %v393
        %v405 = vmul.f32 %v349, %v395
        %v406 = vmul.f32 %v350, %v397
        %v407 = vmul.f32 %v351, %v399
        %v408 = vld [vmem:[#allocation6] sm:$0xff]
        %v409 = vld [vmem:[#allocation6 + $0x8] sm:$0xff]
        %v410 = vld [vmem:[#allocation6 + $0x10] sm:$0xff]
        %v411 = vld [vmem:[#allocation6 + $0x18] sm:$0xff]
        %v412 = vld [vmem:[#allocation6 + $0x20] sm:$0xff]
        %v413 = vld [vmem:[#allocation6 + $0x28] sm:$0xff]
        %v414 = vld [vmem:[#allocation6 + $0x30] sm:$0xff]
        %v415 = vld [vmem:[#allocation6 + $0x38] sm:$0xff]
        %v416 = vld [vmem:[#allocation6 + $0x40] sm:$0xff]
        %v417 = vld [vmem:[#allocation6 + $0x48] sm:$0xff]
        %v418 = vld [vmem:[#allocation6 + $0x50] sm:$0xff]
        %v419 = vld [vmem:[#allocation6 + $0x58] sm:$0xff]
        %v420 = vld [vmem:[#allocation6 + $0x60] sm:$0xff]
        %v421 = vld [vmem:[#allocation6 + $0x68] sm:$0xff]
        %v422 = vld [vmem:[#allocation6 + $0x70] sm:$0xff]
        %v423 = vld [vmem:[#allocation6 + $0x78] sm:$0xff]
        %v424 = vld [vmem:[#allocation6 + $0x80] sm:$0xff]
        %v425 = vld [vmem:[#allocation6 + $0x88] sm:$0xff]
        %v426 = vld [vmem:[#allocation6 + $0x90] sm:$0xff]
        %v427 = vld [vmem:[#allocation6 + $0x98] sm:$0xff]
        %v428 = vld [vmem:[#allocation6 + $0xa0] sm:$0xff]
        %v429 = vld [vmem:[#allocation6 + $0xa8] sm:$0xff]
        %v430 = vld [vmem:[#allocation6 + $0xb0] sm:$0xff]
        %v431 = vld [vmem:[#allocation6 + $0xb8] sm:$0xff]
        %v432 = vld [vmem:[#allocation6 + $0xc0] sm:$0xff]
        %v433 = vld [vmem:[#allocation6 + $0xc8] sm:$0xff]
        %v434 = vld [vmem:[#allocation6 + $0xd0] sm:$0xff]
        %v435 = vld [vmem:[#allocation6 + $0xd8] sm:$0xff]
        %v436 = vld [vmem:[#allocation6 + $0xe0] sm:$0xff]
        %v437 = vld [vmem:[#allocation6 + $0xe8] sm:$0xff]
        %v438 = vld [vmem:[#allocation6 + $0xf0] sm:$0xff]
        %v439 = vld [vmem:[#allocation6 + $0xf8] sm:$0xff]
        %v440 = vld [vmem:[%s3] sm:$0x3]
        %v442 = vlaneseq
        %v443 = vshrl.u32 %v442, 7
        %v444 = vsub.s32 0, %v443
        %v445 = vrot.slane %v440, %v444
        %v446 = vlaneseq
        %v447 = vshrl.u32 %v446, 7
        %v448 = vsub.s32 1, %v447
        %v449 = vrot.slane %v440, %v448
        %452 = vmatprep.subr.mxu0 %v409
        %453 = vmatpush1.msra.mxu0 %v408
        %454 = vmatprep.subr.mxu0 %v411
        %455 = vmatpush1.msra.mxu0 %v410
        %456 = vmatprep.subr.mxu0 %v413
        %457 = vmatpush1.msra.mxu0 %v412
        %458 = vmatprep.subr.mxu0 %v415
        %459 = vmatpush1.msra.mxu0 %v414
        %460 = vmatprep.subr.mxu0 %v417
        %461 = vmatpush1.msra.mxu0 %v416
        %462 = vmatprep.subr.mxu0 %v419
        %463 = vmatpush1.msra.mxu0 %v418
        %464 = vmatprep.subr.mxu0 %v421
        %465 = vmatpush1.msra.mxu0 %v420
        %466 = vmatprep.subr.mxu0 %v423
        %467 = vmatpush1.msra.mxu0 %v422
        %468 = vmatprep.subr.mxu0 %v425
        %469 = vmatpush1.msra.mxu0 %v424
        %470 = vmatprep.subr.mxu0 %v427
        %471 = vmatpush1.msra.mxu0 %v426
        %472 = vmatprep.subr.mxu0 %v429
        %473 = vmatpush1.msra.mxu0 %v428
        %474 = vmatprep.subr.mxu0 %v431
        %475 = vmatpush1.msra.mxu0 %v430
        %476 = vmatprep.subr.mxu0 %v433
        %477 = vmatpush1.msra.mxu0 %v432
        %478 = vmatprep.subr.mxu0 %v435
        %479 = vmatpush1.msra.mxu0 %v434
        %480 = vmatprep.subr.mxu0 %v437
        %481 = vmatpush1.msra.mxu0 %v436
        %482 = vmatprep.subr.mxu0 %v439
        %483 = vmatpush1.msra.mxu0 %v438
        %484 = vmatprep.subr.mxu0 0.0
        %485 = vmatpush1.msra.mxu0 0.0
        %486 = vmatprep.subr.mxu0 0.0
        %487 = vmatpush1.msra.mxu0 0.0
        %488 = vmatprep.subr.mxu0 0.0
        %489 = vmatpush1.msra.mxu0 0.0
        %490 = vmatprep.subr.mxu0 0.0
        %491 = vmatpush1.msra.mxu0 0.0
        %492 = vmatprep.subr.mxu0 0.0
        %493 = vmatpush1.msra.mxu0 0.0
        %494 = vmatprep.subr.mxu0 0.0
        %495 = vmatpush1.msra.mxu0 0.0
        %496 = vmatprep.subr.mxu0 0.0
        %497 = vmatpush1.msra.mxu0 0.0
        %498 = vmatprep.subr.mxu0 0.0
        %499 = vmatpush1.msra.mxu0 0.0
        %500 = vmatprep.subr.mxu0 0.0
        %501 = vmatpush1.msra.mxu0 0.0
        %502 = vmatprep.subr.mxu0 0.0
        %503 = vmatpush1.msra.mxu0 0.0
        %504 = vmatprep.subr.mxu0 0.0
        %505 = vmatpush1.msra.mxu0 0.0
        %506 = vmatprep.subr.mxu0 0.0
        %507 = vmatpush1.msra.mxu0 0.0
        %508 = vmatprep.subr.mxu0 0.0
        %509 = vmatpush1.msra.mxu0 0.0
        %510 = vmatprep.subr.mxu0 0.0
        %511 = vmatpush1.msra.mxu0 0.0
        %512 = vmatprep.subr.mxu0 0.0
        %513 = vmatpush1.msra.mxu0 0.0
        %514 = vmatprep.subr.mxu0 0.0
        %515 = vmatpush1.msra.mxu0 0.0
        %516 = vmatprep.mubr.f32.mxu0 0.0
        %517 = vmatmul.mubr.f32.gmra.mrb[0].mxu0 %v400
        %v518 = vpop.f32.mrb[0].mxu0
        %v519 = vadd.f32 %v445, %v518
        %v520 = vpop.f32.mrb[0].mxu0
        %v521 = vadd.f32 %v449, %v520
        %522 = vmatprep.mubr.f32.mxu0 0.0
        %523 = vmatmul.mubr.f32.gmra.mrb[0].mxu0 %v401
        %v524 = vpop.f32.mrb[0].mxu0
        %v525 = vadd.f32 %v445, %v524
        %v526 = vpop.f32.mrb[0].mxu0
        %v527 = vadd.f32 %v449, %v526
        %528 = vmatprep.mubr.f32.mxu0 0.0
        %529 = vmatmul.mubr.f32.gmra.mrb[0].mxu0 %v402
        %v530 = vpop.f32.mrb[0].mxu0
        %v531 = vadd.f32 %v445, %v530
        %v532 = vpop.f32.mrb[0].mxu0
        %v533 = vadd.f32 %v449, %v532
        %534 = vmatprep.mubr.f32.mxu0 0.0
        %535 = vmatmul.mubr.f32.gmra.mrb[0].mxu0 %v403
        %v536 = vpop.f32.mrb[0].mxu0
        %v537 = vadd.f32 %v445, %v536
        %v538 = vpop.f32.mrb[0].mxu0
        %v539 = vadd.f32 %v449, %v538
        %540 = vmatprep.mubr.f32.mxu0 0.0
        %541 = vmatmul.mubr.f32.gmra.mrb[0].mxu0 %v404
        %v542 = vpop.f32.mrb[0].mxu0
        %v543 = vadd.f32 %v445, %v542
        %v544 = vpop.f32.mrb[0].mxu0
        %v545 = vadd.f32 %v449, %v544
        %546 = vmatprep.mubr.f32.mxu0 0.0
        %547 = vmatmul.mubr.f32.gmra.mrb[0].mxu0 %v405
        %v548 = vpop.f32.mrb[0].mxu0
        %v549 = vadd.f32 %v445, %v548
        %v550 = vpop.f32.mrb[0].mxu0
        %v551 = vadd.f32 %v449, %v550
        %552 = vmatprep.mubr.f32.mxu0 0.0
        %553 = vmatmul.mubr.f32.gmra.mrb[0].mxu0 %v406
        %v554 = vpop.f32.mrb[0].mxu0
        %v555 = vadd.f32 %v445, %v554
        %v556 = vpop.f32.mrb[0].mxu0
        %v557 = vadd.f32 %v449, %v556
        %558 = vmatprep.mubr.f32.mxu0 0.0
        %559 = vmatmul.mubr.f32.gmra.mrb[0].mxu0 %v407
        %v560 = vpop.f32.mrb[0].mxu0
        %v561 = vadd.f32 %v445, %v560
        %v562 = vpop.f32.mrb[0].mxu0
        %v563 = vadd.f32 %v449, %v562
        %564 = vdwg.mxu0
        %v565 = vld [vmem:[%s285] sm:$0xff]
        %v566 = vld [vmem:[%s285 + $0x8] sm:$0xff]
        %v567 = vld [vmem:[%s285 + $0x10] sm:$0xff]
        %v568 = vld [vmem:[%s285 + $0x18] sm:$0xff]
        %v569 = vld [vmem:[%s285 + $0x20] sm:$0xff]
        %v570 = vld [vmem:[%s285 + $0x28] sm:$0xff]
        %v571 = vld [vmem:[%s285 + $0x30] sm:$0xff]
        %v572 = vld [vmem:[%s285 + $0x38] sm:$0xff]
        %v573 = vmul.f32 %v565, %v565
        %v574 = vmul.f32 %v566, %v566
        %v575 = vmul.f32 %v567, %v567
        %v576 = vmul.f32 %v568, %v568
        %v577 = vmul.f32 %v569, %v569
        %v578 = vmul.f32 %v570, %v570
        %v579 = vmul.f32 %v571, %v571
        %v580 = vmul.f32 %v572, %v572
        %581 = vadd.xlane.f32.xlu0 %v573
        %v582 = vpop.xlane.xlu0 %581
        %583 = vadd.xlane.f32.xlu0 %v574
        %v584 = vpop.xlane.xlu0 %583
        %585 = vadd.xlane.f32.xlu0 %v575
        %v586 = vpop.xlane.xlu0 %585
        %587 = vadd.xlane.f32.xlu0 %v576
        %v588 = vpop.xlane.xlu0 %587
        %589 = vadd.xlane.f32.xlu0 %v577
        %v590 = vpop.xlane.xlu0 %589
        %591 = vadd.xlane.f32.xlu0 %v578
        %v592 = vpop.xlane.xlu0 %591
        %593 = vadd.xlane.f32.xlu0 %v579
        %v594 = vpop.xlane.xlu0 %593
        %595 = vadd.xlane.f32.xlu0 %v580
        %v596 = vpop.xlane.xlu0 %595
        %v597 = vrcp.pop 128.0
        %v598 = vmul.f32 %v582, %v597
        %v599 = vmul.f32 %v584, %v597
        %v600 = vmul.f32 %v586, %v597
        %v601 = vmul.f32 %v588, %v597
        %v602 = vmul.f32 %v590, %v597
        %v603 = vmul.f32 %v592, %v597
        %v604 = vmul.f32 %v594, %v597
        %v605 = vmul.f32 %v596, %v597
        %v606 = vadd.f32 %v598, 1e-06
        %v607 = vadd.f32 %v599, 1e-06
        %v608 = vadd.f32 %v600, 1e-06
        %v609 = vadd.f32 %v601, 1e-06
        %v610 = vadd.f32 %v602, 1e-06
        %v611 = vadd.f32 %v603, 1e-06
        %v612 = vadd.f32 %v604, 1e-06
        %v613 = vadd.f32 %v605, 1e-06
        %v614 = vrsqrt.pop %v606
        %v615 = vrsqrt.pop %v607
        %v616 = vrsqrt.pop %v608
        %v617 = vrsqrt.pop %v609
        %v618 = vrsqrt.pop %v610
        %v619 = vrsqrt.pop %v611
        %v620 = vrsqrt.pop %v612
        %v621 = vrsqrt.pop %v613
        %v622 = vmul.f32 %v565, %v614
        %v623 = vmul.f32 %v566, %v615
        %v624 = vmul.f32 %v567, %v616
        %v625 = vmul.f32 %v568, %v617
        %v626 = vmul.f32 %v569, %v618
        %v627 = vmul.f32 %v570, %v619
        %v628 = vmul.f32 %v571, %v620
        %v629 = vmul.f32 %v572, %v621
        %v630 = vadd.f32 %v521, 1.0
        %v631 = vadd.f32 %v527, 1.0
        %v632 = vadd.f32 %v533, 1.0
        %v633 = vadd.f32 %v539, 1.0
        %v634 = vadd.f32 %v545, 1.0
        %v635 = vadd.f32 %v551, 1.0
        %v636 = vadd.f32 %v557, 1.0
        %v637 = vadd.f32 %v563, 1.0
        %v638 = vmul.f32 %v622, %v630
        %v639 = vmul.f32 %v623, %v631
        %v640 = vmul.f32 %v624, %v632
        %v641 = vmul.f32 %v625, %v633
        %v642 = vmul.f32 %v626, %v634
        %v643 = vmul.f32 %v627, %v635
        %v644 = vmul.f32 %v628, %v636
        %v645 = vmul.f32 %v629, %v637
        %v646 = vadd.f32 %v638, %v519
        %v647 = vadd.f32 %v639, %v525
        %v648 = vadd.f32 %v640, %v531
        %v649 = vadd.f32 %v641, %v537
        %v650 = vadd.f32 %v642, %v543
        %v651 = vadd.f32 %v643, %v549
        %v652 = vadd.f32 %v644, %v555
        %v653 = vadd.f32 %v645, %v561
        %v654 = vld [vmem:[#allocation7] sm:$0xff]
        %v655 = vld [vmem:[#allocation7 + $0x8] sm:$0xff]
        %v656 = vld [vmem:[#allocation7 + $0x10] sm:$0xff]
        %v657 = vld [vmem:[#allocation7 + $0x18] sm:$0xff]
        %v658 = vld [vmem:[#allocation7 + $0x20] sm:$0xff]
        %v659 = vld [vmem:[#allocation7 + $0x28] sm:$0xff]
        %v660 = vld [vmem:[#allocation7 + $0x30] sm:$0xff]
        %v661 = vld [vmem:[#allocation7 + $0x38] sm:$0xff]
        %v662 = vld [vmem:[#allocation7 + $0x40] sm:$0xff]
        %v663 = vld [vmem:[#allocation7 + $0x48] sm:$0xff]
        %v664 = vld [vmem:[#allocation7 + $0x50] sm:$0xff]
        %v665 = vld [vmem:[#allocation7 + $0x58] sm:$0xff]
        %v666 = vld [vmem:[#allocation7 + $0x60] sm:$0xff]
        %v667 = vld [vmem:[#allocation7 + $0x68] sm:$0xff]
        %v668 = vld [vmem:[#allocation7 + $0x70] sm:$0xff]
        %v669 = vld [vmem:[#allocation7 + $0x78] sm:$0xff]
        %v670 = vld [vmem:[%s5] sm:$0x1]
        %v672 = vlaneseq
        %v673 = vshrl.u32 %v672, 7
        %v674 = vsub.s32 0, %v673
        %v675 = vrot.slane %v670, %v674
        %677 = vmatprep.subr.mxu0 0.0
        %678 = vmatpush1.msra.mxu0 %v654
        %679 = vmatprep.subr.mxu0 0.0
        %680 = vmatpush1.msra.mxu0 %v655
        %681 = vmatprep.subr.mxu0 0.0
        %682 = vmatpush1.msra.mxu0 %v656
        %683 = vmatprep.subr.mxu0 0.0
        %684 = vmatpush1.msra.mxu0 %v657
        %685 = vmatprep.subr.mxu0 0.0
        %686 = vmatpush1.msra.mxu0 %v658
        %687 = vmatprep.subr.mxu0 0.0
        %688 = vmatpush1.msra.mxu0 %v659
        %689 = vmatprep.subr.mxu0 0.0
        %690 = vmatpush1.msra.mxu0 %v660
        %691 = vmatprep.subr.mxu0 0.0
        %692 = vmatpush1.msra.mxu0 %v661
        %693 = vmatprep.subr.mxu0 0.0
        %694 = vmatpush1.msra.mxu0 %v662
        %695 = vmatprep.subr.mxu0 0.0
        %696 = vmatpush1.msra.mxu0 %v663
        %697 = vmatprep.subr.mxu0 0.0
        %698 = vmatpush1.msra.mxu0 %v664
        %699 = vmatprep.subr.mxu0 0.0
        %700 = vmatpush1.msra.mxu0 %v665
        %701 = vmatprep.subr.mxu0 0.0
        %702 = vmatpush1.msra.mxu0 %v666
        %703 = vmatprep.subr.mxu0 0.0
        %704 = vmatpush1.msra.mxu0 %v667
        %705 = vmatprep.subr.mxu0 0.0
        %706 = vmatpush1.msra.mxu0 %v668
        %707 = vmatprep.subr.mxu0 0.0
        %708 = vmatpush1.msra.mxu0 %v669
        %709 = vmatprep.subr.mxu0 0.0
        %710 = vmatpush1.msra.mxu0 0.0
        %711 = vmatprep.subr.mxu0 0.0
        %712 = vmatpush1.msra.mxu0 0.0
        %713 = vmatprep.subr.mxu0 0.0
        %714 = vmatpush1.msra.mxu0 0.0
        %715 = vmatprep.subr.mxu0 0.0
        %716 = vmatpush1.msra.mxu0 0.0
        %717 = vmatprep.subr.mxu0 0.0
        %718 = vmatpush1.msra.mxu0 0.0
        %719 = vmatprep.subr.mxu0 0.0
        %720 = vmatpush1.msra.mxu0 0.0
        %721 = vmatprep.subr.mxu0 0.0
        %722 = vmatpush1.msra.mxu0 0.0
        %723 = vmatprep.subr.mxu0 0.0
        %724 = vmatpush1.msra.mxu0 0.0
        %725 = vmatprep.subr.mxu0 0.0
        %726 = vmatpush1.msra.mxu0 0.0
        %727 = vmatprep.subr.mxu0 0.0
        %728 = vmatpush1.msra.mxu0 0.0
        %729 = vmatprep.subr.mxu0 0.0
        %730 = vmatpush1.msra.mxu0 0.0
        %731 = vmatprep.subr.mxu0 0.0
        %732 = vmatpush1.msra.mxu0 0.0
        %733 = vmatprep.subr.mxu0 0.0
        %734 = vmatpush1.msra.mxu0 0.0
        %735 = vmatprep.subr.mxu0 0.0
        %736 = vmatpush1.msra.mxu0 0.0
        %737 = vmatprep.subr.mxu0 0.0
        %738 = vmatpush1.msra.mxu0 0.0
        %739 = vmatprep.subr.mxu0 0.0
        %740 = vmatpush1.msra.mxu0 0.0
        %741 = vmatprep.mubr.f32.mxu0 0.0
        %742 = vmatmul.mubr.f32.gmra.mrb[0].mxu0 %v646
        %v743 = vpop.f32.mrb[0].mxu0
        %v744 = vadd.f32 %v675, %v743
        %v745 = vpop.f32.mrb[0].mxu0
        %746 = vmatprep.mubr.f32.mxu0 0.0
        %747 = vmatmul.mubr.f32.gmra.mrb[0].mxu0 %v647
        %v748 = vpop.f32.mrb[0].mxu0
        %v749 = vadd.f32 %v675, %v748
        %v750 = vpop.f32.mrb[0].mxu0
        %751 = vmatprep.mubr.f32.mxu0 0.0
        %752 = vmatmul.mubr.f32.gmra.mrb[0].mxu0 %v648
        %v753 = vpop.f32.mrb[0].mxu0
        %v754 = vadd.f32 %v675, %v753
        %v755 = vpop.f32.mrb[0].mxu0
        %756 = vmatprep.mubr.f32.mxu0 0.0
        %757 = vmatmul.mubr.f32.gmra.mrb[0].mxu0 %v649
        %v758 = vpop.f32.mrb[0].mxu0
        %v759 = vadd.f32 %v675, %v758
        %v760 = vpop.f32.mrb[0].mxu0
        %761 = vmatprep.mubr.f32.mxu0 0.0
        %762 = vmatmul.mubr.f32.gmra.mrb[0].mxu0 %v650
        %v763 = vpop.f32.mrb[0].mxu0
        %v764 = vadd.f32 %v675, %v763
        %v765 = vpop.f32.mrb[0].mxu0
        %766 = vmatprep.mubr.f32.mxu0 0.0
        %767 = vmatmul.mubr.f32.gmra.mrb[0].mxu0 %v651
        %v768 = vpop.f32.mrb[0].mxu0
        %v769 = vadd.f32 %v675, %v768
        %v770 = vpop.f32.mrb[0].mxu0
        %771 = vmatprep.mubr.f32.mxu0 0.0
        %772 = vmatmul.mubr.f32.gmra.mrb[0].mxu0 %v652
        %v773 = vpop.f32.mrb[0].mxu0
        %v774 = vadd.f32 %v675, %v773
        %v775 = vpop.f32.mrb[0].mxu0
        %776 = vmatprep.mubr.f32.mxu0 0.0
        %777 = vmatmul.mubr.f32.gmra.mrb[0].mxu0 %v653
        %v778 = vpop.f32.mrb[0].mxu0
        %v779 = vadd.f32 %v675, %v778
        %v780 = vpop.f32.mrb[0].mxu0
        %781 = vdwg.mxu0
        %782 = vst [vmem:[%s342] sm:$0xff] %v744
        %783 = vst [vmem:[%s342 + $0x8] sm:$0xff] %v749
        %784 = vst [vmem:[%s342 + $0x10] sm:$0xff] %v754
        %785 = vst [vmem:[%s342 + $0x18] sm:$0xff] %v759
        %786 = vst [vmem:[%s342 + $0x20] sm:$0xff] %v764
        %787 = vst [vmem:[%s342 + $0x28] sm:$0xff] %v769
        %788 = vst [vmem:[%s342 + $0x30] sm:$0xff] %v774
        %789 = vst [vmem:[%s342 + $0x38] sm:$0xff] %v779
        %s790 = smul.u32 8, %s24
        %p791 = scmp.lt.s32.totalorder %s790, 15
        %s792 = scalar_select %p791, %s790, 15
        %s793 = smul.addr %s792, 8
        %s794 = scalar_lea.vmem %s6, %s793
        // Predicated region
        $region61: #{final_layer.1} parent=43 // pred_check
          %p795 = pneg %p178
        $region62: #{final_layer.1} parent=43 // pred_check_branch
          %797 = sbr.rel (%p795) target = $region64
        $region63: #{final_layer.1} parent=43 // pred_region
          %s798 = smul.u32 8, %s24
        $region64: #{final_layer.1} parent=43 // pred_fallthru
          _
      $region44: #{final_layer.1} parent=5 // pred_fallthru
        _
      %p799 = scmp.le.s32.totalorder 2, %s19
      // Predicated region
      $region65: #{final_layer.1} parent=5 // pred_check
        %p800 = pneg %p799
      $region66: #{final_layer.1} parent=5 // pred_check_branch
        %802 = sbr.rel (%p800) target = $region68
      $region67: #{final_layer.1} parent=5 // pred_region
        %s803 = ssub.s32 %s19, 2
        // Predicated region
        $region69: #{final_layer.1} parent=67 // pred_check
          %p804 = pneg %p184
        $region70: #{final_layer.1} parent=67 // pred_check_branch
          %806 = sbr.rel (%p804) target = $region72
        $region71: #{final_layer.1} parent=67 // pred_region
          %s807 = smul.u32 8, %s25
          %p808 = scmp.lt.s32.totalorder %s807, 15
          %s809 = scalar_select %p808, %s807, 15
          %s810 = smul.addr %s809, 8
          %s811 = scalar_lea.vmem %s6, %s810
        $region72: #{final_layer.1} parent=67 // pred_fallthru
          _
      $region68: #{final_layer.1} parent=5 // pred_fallthru
        _
    $region6: #{final_layer.1} parent=1 // loop_footer
      %s23 = sadd.s32 1, %s19
    $region7: #{final_layer.1} parent=1 // loop_footer_branch
      %18 = sbr.rel target = $region3
    $region8: #{final_layer.1} parent=1 // loop_exit
      _
    %812 = vsyncpa [#allocation3], 1
    %s813 = scalar_lea.sflag [#allocation3], 1
    %814 = vsyncpa %s813, 1
    %815 = vsyncpa [#allocation5], 1
    %s816 = scalar_lea.sflag [#allocation5], 1
    %817 = vsyncpa %s816, 1
    %818 = vsyncpa [#allocation8], 1

</llo_original>
